<compile_context>
chip_gen: v5e
topology: v5e:2x2
jax: 0.10.0
libtpu: 0.0.40
codegen_flags: <defaults>
</compile_context>

<pallas_src>
import functools

import jax
import jax.numpy as jnp
import numpy as np
from jax import lax
from jax.experimental import pallas as pl
from jax.experimental.pallas import tpu as pltpu


# ---------------------------------------------------------------------------
# Kernel: one grid step = one block of nb images, activations (C, nb*H*W).
# ---------------------------------------------------------------------------
def bottleneck_kernel(x_ref, w1_ref, w2_ref, w3_ref, b_ref, m_ref, o_ref, *, W):
    L = x_ref.shape[1]                       # nb * H * W lanes
    width = w1_ref.shape[0]
    cout = w3_ref.shape[0]

    # Only the bf16 copy is needed now; the f32 residual is re-read at the end
    # (short live range -> less vld/vst spill pressure at large shapes).
    xb = x_ref[...].astype(jnp.bfloat16)

    # ---- conv1 (1x1, BN1 scale folded into weights) + bias + relu ----------
    y1 = jnp.dot(w1_ref[...], xb, preferred_element_type=jnp.float32)
    y1 = jnp.maximum(y1 + b_ref[0:width, :], 0.0)            # (width, L) f32

    # ---- conv2 (3x3, stride 1, pad 1): im2col -> single big-K matmul -------
    # Shifted windows via lane rolls (XLU) + one multiply by a precomputed
    # {0,1} border mask per tap (masks are periodic per image, so cross-image
    # roll wrap is always zeroed).
    taps = []
    for ky in range(3):
        for kx in range(3):
            t = ky * 3 + kx
            s = (ky - 1) * W + (kx - 1)
            rolled = y1 if s == 0 else pltpu.roll(y1, shift=(-s) % L, axis=1)
            taps.append(rolled * m_ref[t])                    # (width, L) f32
    im2col = jnp.concatenate(taps, axis=0).astype(jnp.bfloat16)  # (9*width, L)

    y2 = jnp.dot(w2_ref[...], im2col, preferred_element_type=jnp.float32)
    y2 = jnp.maximum(y2 + b_ref[width:2 * width, :], 0.0)     # (width, L) f32

    # ---- conv3 (1x1, BN3 scale folded) + bias + residual add + relu --------
    y3 = jnp.dot(w3_ref[...], y2.astype(jnp.bfloat16),
                 preferred_element_type=jnp.float32)          # (Cout, L) f32
    o_ref[...] = jnp.maximum(
        y3 + b_ref[2 * width:2 * width + cout, :] + x_ref[...], 0.0
    ).astype(o_ref.dtype)


# ---------------------------------------------------------------------------
# Wrapper
# ---------------------------------------------------------------------------
def _make_masks(H, W, nb):
    """(9, 1, nb*H*W) f32 {0,1} border masks, periodic per image."""
    HW = H * W
    q = np.arange(HW)
    row, col = q // W, q % W
    masks = []
    for ky in range(3):
        for kx in range(3):
            dy, dx = ky - 1, kx - 1
            m = ((row + dy >= 0) & (row + dy < H) &
                 (col + dx >= 0) & (col + dx < W))
            masks.append(np.tile(m, nb))
    return jnp.asarray(np.stack(masks, 0)[:, None, :], dtype=jnp.float32)


def _vmem_estimate(Cin, Cout, width, L):
    f32, bf16 = 4, 2
    est = 2 * (Cin + Cout) * L * f32            # double-buffered x / out blocks
    est += Cin * L * bf16                       # xb
    est += (2 * width + Cout) * L * f32         # y1, y2, y3
    est += 9 * width * L * (2 * f32 + bf16)     # taps + concat + bf16 cast
    est += 2 * 9 * L * f32                      # masks (double-buffered)
    est += 2 * (width * Cin + 9 * width * width + Cout * width) * bf16
    return int(est * 1.5)                       # headroom


@functools.partial(jax.jit, static_argnames=("images_per_block",))
def bottleneck_pallas(x_nchw, w1, w2, w3, bcat, *, images_per_block=None):
    """x_nchw: [N, Cin, H, W] f32; params from prepare_params.

    Returns [N, Cout, H, W] f32 (Cout == Cin for the residual path)."""
    N, Cin, H, W = x_nchw.shape
    HW = H * W
    width = w1.shape[0]
    Cout = w3.shape[0]

    nb = N if images_per_block is None else images_per_block
    assert N % nb == 0
    L = nb * HW
    assert (L % 128 == 0) or (nb == N), "lane block must be 128-aligned"

    masks = _make_masks(H, W, nb)                       # (9, 1, L), constant

    # NCHW -> (C, N*HW): channels on sublanes, fused batch*spatial on lanes.
    x_flat = x_nchw.reshape(N, Cin, HW).transpose(1, 0, 2).reshape(Cin, N * HW)

    kernel = functools.partial(bottleneck_kernel, W=W)
    nbias = bcat.shape[0]

    grid_spec = pltpu.PrefetchScalarGridSpec(
        num_scalar_prefetch=0,
        grid=(N // nb,),
        in_specs=[
            pl.BlockSpec((Cin, L), lambda b: (0, b)),            # x block
            pl.BlockSpec((width, Cin), lambda b: (0, 0)),         # w1 (bf16)
            pl.BlockSpec((width, 9 * width), lambda b: (0, 0)),   # w2 (bf16)
            pl.BlockSpec((Cout, width), lambda b: (0, 0)),        # w3 (bf16)
            pl.BlockSpec((nbias, 1), lambda b: (0, 0)),           # biases (f32)
            pl.BlockSpec((9, 1, L), lambda b: (0, 0, 0)),         # masks (f32)
        ],
        out_specs=pl.BlockSpec((Cout, L), lambda b: (0, b)),
    )

    vmem_limit = min(64 * 1024 * 1024,
                     max(32 * 1024 * 1024, _vmem_estimate(Cin, Cout, width, L)))

    out_flat = pl.pallas_call(
        kernel,
        out_shape=jax.ShapeDtypeStruct((Cout, N * HW), jnp.float32),
        grid_spec=grid_spec,
        compiler_params=pltpu.CompilerParams(
            dimension_semantics=("parallel",),
            vmem_limit_bytes=vmem_limit),
    )(x_flat, w1, w2, w3, bcat, masks)

    return (out_flat.reshape(Cout, N, HW).transpose(1, 0, 2)
            .reshape(N, Cout, H, W))


# ---------------------------------------------------------------------------
# Parameter preparation: fold BN (inference) into weights, cast to bf16.
# ---------------------------------------------------------------------------
def fold_bn(gamma, beta, mean, var, eps=1e-5):
    scale = gamma / jnp.sqrt(var + eps)
    bias = beta - mean * scale
    return scale, bias


def prepare_params(W1, W2, W3, bn1, bn2, bn3, eps=1e-5):
    """PyTorch OIHW weights + BN params -> kernel layout.

      w1:   (width, Cin)           bf16  (BN1 scale folded)
      w2:   (width, 9*width)       bf16  cols ordered (ky, kx, in-chan)
      w3:   (Cout, width)          bf16  (BN3 scale folded)
      bcat: (2*width + Cout, 1)    f32   [b1; b2; b3]
    """
    s1, b1 = fold_bn(*bn1, eps=eps)
    s2, b2 = fold_bn(*bn2, eps=eps)
    s3, b3 = fold_bn(*bn3, eps=eps)

    w1_k = (W1[:, :, 0, 0] * s1[:, None]).astype(jnp.bfloat16)
    w2_k = jnp.transpose(W2 * s2[:, None, None, None], (0, 2, 3, 1))
    w2_k = w2_k.reshape(W2.shape[0], -1).astype(jnp.bfloat16)
    w3_k = (W3[:, :, 0, 0] * s3[:, None]).astype(jnp.bfloat16)
    bcat = jnp.concatenate([b1, b2, b3]).reshape(-1, 1).astype(jnp.float32)
    return w1_k, w2_k, w3_k, bcat


# ---------------------------------------------------------------------------
# Pure-JAX reference (NCHW / OIHW, exactly the PyTorch forward semantics)
# ---------------------------------------------------------------------------
def bottleneck_ref(x, W1, W2, W3, s1, b1, s2, b2, s3, b3):
    dn = ("NCHW", "OIHW", "NCHW")
    def bn(y, s, b):
        return y * s[None, :, None, None] + b[None, :, None, None]
    y = lax.conv_general_dilated(x, W1, (1, 1), "VALID", dimension_numbers=dn)
    y = jnp.maximum(bn(y, s1, b1), 0.0)
    y = lax.conv_general_dilated(y, W2, (1, 1), ((1, 1), (1, 1)),
                                 dimension_numbers=dn)
    y = jnp.maximum(bn(y, s2, b2), 0.0)
    y = lax.conv_general_dilated(y, W3, (1, 1), "VALID", dimension_numbers=dn)
    y = bn(y, s3, b3)
    return jnp.maximum(y + x, 0.0)


if __name__ == "__main__":
    # Module config: Bottleneck(inplanes=32, planes=8) -> width=8, out=32.
    # (inplanes == planes * expansion so downsample=None is valid.)
    N, inplanes, H, W = 4, 32, 16, 16
    planes = 8
    width = planes          # base_width=64, groups=1
    cout = planes * 4       # expansion = 4

    key = jax.random.PRNGKey(0)
    k = jax.random.split(key, 16)

    x = jax.random.normal(k[0], (N, inplanes, H, W), jnp.float32)

    # PyTorch-layout conv weights (OIHW), bias=False.
    W1 = jax.random.normal(k[1], (width, inplanes, 1, 1), jnp.float32) * 0.2
    W2 = jax.random.normal(k[2], (width, width, 3, 3), jnp.float32) * 0.2
    W3 = jax.random.normal(k[3], (cout, width, 1, 1), jnp.float32) * 0.2

    # BatchNorm (inference) params, deterministic and non-trivial.
    def bn_params(kk, c):
        g = 1.0 + 0.1 * jax.random.normal(kk[0], (c,), jnp.float32)
        b = 0.1 * jax.random.normal(kk[1], (c,), jnp.float32)
        m = 0.1 * jax.random.normal(kk[2], (c,), jnp.float32)
        v = 1.0 + 0.1 * jax.nn.softplus(jax.random.normal(kk[3], (c,)))
        return g, b, m, v

    bn1 = bn_params(k[4:8], width)
    bn2 = bn_params(k[8:12], width)
    bn3 = bn_params(k[12:16], cout)

    w1_k, w2_k, w3_k, bcat_k = prepare_params(W1, W2, W3, bn1, bn2, bn3)

    # 2 images fused along the lane axis per grid step, 2 grid steps
    # (exercises both the periodic masks and the batch-block index map; the
    # parallel grid axis also feeds both TensorCores on v7x).
    out = bottleneck_pallas(x, w1_k, w2_k, w3_k, bcat_k, images_per_block=2)
    out = jax.block_until_ready(out)

    s1, b1 = fold_bn(*bn1)
    s2, b2 = fold_bn(*bn2)
    s3, b3 = fold_bn(*bn3)
    ref = bottleneck_ref(x, W1, W2, W3, s1, b1, s2, b2, s3, b3)
    ref = jax.block_until_ready(ref)

    # bf16 MXU operands with f32 accumulation -> loosened tolerance vs f32 ref.
    np.testing.assert_allclose(np.asarray(out), np.asarray(ref),
                               rtol=5e-2, atol=5e-2)
    print("KERNEL_OK")
</pallas_src>

<mosaic_0001>
module attributes {stable_mosaic.version = 11 : i64} {
  func.func @bottleneck_kernel(%arg0: i32, %arg1: memref<32x512xf32, #tpu.memory_space<vmem>>, %arg2: memref<8x32xbf16, #tpu.memory_space<vmem>>, %arg3: memref<8x72xbf16, #tpu.memory_space<vmem>>, %arg4: memref<32x8xbf16, #tpu.memory_space<vmem>>, %arg5: memref<48x1xf32, #tpu.memory_space<vmem>>, %arg6: memref<9x1x512xf32, #tpu.memory_space<vmem>>, %arg7: memref<32x512xf32, #tpu.memory_space<vmem>>) attributes {dimension_semantics = [#tpu.dimension_semantics<parallel>], iteration_bounds = array<i64: 2>, scalar_prefetch = 0 : i64, scratch_operands = 0 : i64, tpu.core_type = #tpu.core_type<tc>, window_params = [{transform_indices = @transform_0, window_bounds = array<i64: 32, 512>}, {pipeline_mode = #tpu.pipeline_mode<synchronous>, transform_indices = @transform_1, window_bounds = array<i64: 8, 32>}, {pipeline_mode = #tpu.pipeline_mode<synchronous>, transform_indices = @transform_2, window_bounds = array<i64: 8, 72>}, {pipeline_mode = #tpu.pipeline_mode<synchronous>, transform_indices = @transform_3, window_bounds = array<i64: 32, 8>}, {pipeline_mode = #tpu.pipeline_mode<synchronous>, transform_indices = @transform_4, window_bounds = array<i64: 48, 1>}, {pipeline_mode = #tpu.pipeline_mode<synchronous>, transform_indices = @transform_5, window_bounds = array<i64: 9, 1, 512>}, {transform_indices = @transform_6, window_bounds = array<i64: 32, 512>}]} {
    %c0 = arith.constant 0 : index
    %c0_0 = arith.constant 0 : index
    %0 = vector.load %arg1[%c0, %c0_0] : memref<32x512xf32, #tpu.memory_space<vmem>>, vector<32x512xf32>
    %1 = arith.truncf %0 : vector<32x512xf32> to vector<32x512xbf16>
    %c0_1 = arith.constant 0 : index
    %c0_2 = arith.constant 0 : index
    %2 = vector.load %arg2[%c0_1, %c0_2] : memref<8x32xbf16, #tpu.memory_space<vmem>>, vector<8x32xbf16>
    %cst = arith.constant dense<0.000000e+00> : vector<8x512xf32>
    %3 = tpu.matmul %2, %1, %cst {dimension_numbers = #tpu.dot_dimension_numbers<[1], [0], [0], [1], [0, 0, 1, 1], [], []>} : vector<8x32xbf16>, vector<32x512xbf16>, vector<8x512xf32> -> vector<8x512xf32>
    %c0_3 = arith.constant 0 : index
    %c0_4 = arith.constant 0 : index
    %4 = vector.load %arg5[%c0_3, %c0_4] : memref<48x1xf32, #tpu.memory_space<vmem>>, vector<8x1xf32>
    %5 = vector.broadcast %4 : vector<8x1xf32> to vector<8x512xf32>
    %6 = arith.addf %3, %5 : vector<8x512xf32>
    %cst_5 = arith.constant 0.000000e+00 : f32
    %7 = vector.broadcast %cst_5 : f32 to vector<8x512xf32>
    %8 = arith.maximumf %6, %7 : vector<8x512xf32>
    %c17_i32 = arith.constant 17 : i32
    %9 = tpu.dynamic_rotate %8 by %c17_i32 dim 1 : vector<8x512xf32>, i32 -> vector<8x512xf32>
    %c0_6 = arith.constant 0 : index
    %c0_7 = arith.constant 0 : index
    %c0_8 = arith.constant 0 : index
    %10 = vector.load %arg6[%c0_6, %c0_7, %c0_8] : memref<9x1x512xf32, #tpu.memory_space<vmem>>, vector<1x1x512xf32>
    %11 = vector.shape_cast %10 : vector<1x1x512xf32> to vector<1x512xf32>
    %12 = vector.broadcast %11 : vector<1x512xf32> to vector<8x512xf32>
    %13 = arith.mulf %9, %12 : vector<8x512xf32>
    %c16_i32 = arith.constant 16 : i32
    %14 = tpu.dynamic_rotate %8 by %c16_i32 dim 1 : vector<8x512xf32>, i32 -> vector<8x512xf32>
    %c1 = arith.constant 1 : index
    %c0_9 = arith.constant 0 : index
    %c0_10 = arith.constant 0 : index
    %15 = vector.load %arg6[%c1, %c0_9, %c0_10] : memref<9x1x512xf32, #tpu.memory_space<vmem>>, vector<1x1x512xf32>
    %16 = vector.shape_cast %15 : vector<1x1x512xf32> to vector<1x512xf32>
    %17 = vector.broadcast %16 : vector<1x512xf32> to vector<8x512xf32>
    %18 = arith.mulf %14, %17 : vector<8x512xf32>
    %c15_i32 = arith.constant 15 : i32
    %19 = tpu.dynamic_rotate %8 by %c15_i32 dim 1 : vector<8x512xf32>, i32 -> vector<8x512xf32>
    %c2 = arith.constant 2 : index
    %c0_11 = arith.constant 0 : index
    %c0_12 = arith.constant 0 : index
    %20 = vector.load %arg6[%c2, %c0_11, %c0_12] : memref<9x1x512xf32, #tpu.memory_space<vmem>>, vector<1x1x512xf32>
    %21 = vector.shape_cast %20 : vector<1x1x512xf32> to vector<1x512xf32>
    %22 = vector.broadcast %21 : vector<1x512xf32> to vector<8x512xf32>
    %23 = arith.mulf %19, %22 : vector<8x512xf32>
    %c1_i32 = arith.constant 1 : i32
    %24 = tpu.dynamic_rotate %8 by %c1_i32 dim 1 : vector<8x512xf32>, i32 -> vector<8x512xf32>
    %c3 = arith.constant 3 : index
    %c0_13 = arith.constant 0 : index
    %c0_14 = arith.constant 0 : index
    %25 = vector.load %arg6[%c3, %c0_13, %c0_14] : memref<9x1x512xf32, #tpu.memory_space<vmem>>, vector<1x1x512xf32>
    %26 = vector.shape_cast %25 : vector<1x1x512xf32> to vector<1x512xf32>
    %27 = vector.broadcast %26 : vector<1x512xf32> to vector<8x512xf32>
    %28 = arith.mulf %24, %27 : vector<8x512xf32>
    %c4 = arith.constant 4 : index
    %c0_15 = arith.constant 0 : index
    %c0_16 = arith.constant 0 : index
    %29 = vector.load %arg6[%c4, %c0_15, %c0_16] : memref<9x1x512xf32, #tpu.memory_space<vmem>>, vector<1x1x512xf32>
    %30 = vector.shape_cast %29 : vector<1x1x512xf32> to vector<1x512xf32>
    %31 = vector.broadcast %30 : vector<1x512xf32> to vector<8x512xf32>
    %32 = arith.mulf %8, %31 : vector<8x512xf32>
    %c511_i32 = arith.constant 511 : i32
    %33 = tpu.dynamic_rotate %8 by %c511_i32 dim 1 : vector<8x512xf32>, i32 -> vector<8x512xf32>
    %c5 = arith.constant 5 : index
    %c0_17 = arith.constant 0 : index
    %c0_18 = arith.constant 0 : index
    %34 = vector.load %arg6[%c5, %c0_17, %c0_18] : memref<9x1x512xf32, #tpu.memory_space<vmem>>, vector<1x1x512xf32>
    %35 = vector.shape_cast %34 : vector<1x1x512xf32> to vector<1x512xf32>
    %36 = vector.broadcast %35 : vector<1x512xf32> to vector<8x512xf32>
    %37 = arith.mulf %33, %36 : vector<8x512xf32>
    %c497_i32 = arith.constant 497 : i32
    %38 = tpu.dynamic_rotate %8 by %c497_i32 dim 1 : vector<8x512xf32>, i32 -> vector<8x512xf32>
    %c6 = arith.constant 6 : index
    %c0_19 = arith.constant 0 : index
    %c0_20 = arith.constant 0 : index
    %39 = vector.load %arg6[%c6, %c0_19, %c0_20] : memref<9x1x512xf32, #tpu.memory_space<vmem>>, vector<1x1x512xf32>
    %40 = vector.shape_cast %39 : vector<1x1x512xf32> to vector<1x512xf32>
    %41 = vector.broadcast %40 : vector<1x512xf32> to vector<8x512xf32>
    %42 = arith.mulf %38, %41 : vector<8x512xf32>
    %c496_i32 = arith.constant 496 : i32
    %43 = tpu.dynamic_rotate %8 by %c496_i32 dim 1 : vector<8x512xf32>, i32 -> vector<8x512xf32>
    %c7 = arith.constant 7 : index
    %c0_21 = arith.constant 0 : index
    %c0_22 = arith.constant 0 : index
    %44 = vector.load %arg6[%c7, %c0_21, %c0_22] : memref<9x1x512xf32, #tpu.memory_space<vmem>>, vector<1x1x512xf32>
    %45 = vector.shape_cast %44 : vector<1x1x512xf32> to vector<1x512xf32>
    %46 = vector.broadcast %45 : vector<1x512xf32> to vector<8x512xf32>
    %47 = arith.mulf %43, %46 : vector<8x512xf32>
    %c495_i32 = arith.constant 495 : i32
    %48 = tpu.dynamic_rotate %8 by %c495_i32 dim 1 : vector<8x512xf32>, i32 -> vector<8x512xf32>
    %c8 = arith.constant 8 : index
    %c0_23 = arith.constant 0 : index
    %c0_24 = arith.constant 0 : index
    %49 = vector.load %arg6[%c8, %c0_23, %c0_24] : memref<9x1x512xf32, #tpu.memory_space<vmem>>, vector<1x1x512xf32>
    %50 = vector.shape_cast %49 : vector<1x1x512xf32> to vector<1x512xf32>
    %51 = vector.broadcast %50 : vector<1x512xf32> to vector<8x512xf32>
    %52 = arith.mulf %48, %51 : vector<8x512xf32>
    %53 = tpu.concatenate %13, %18, %23, %28, %32, %37, %42, %47, %52 in 0 : vector<8x512xf32>, vector<8x512xf32>, vector<8x512xf32>, vector<8x512xf32>, vector<8x512xf32>, vector<8x512xf32>, vector<8x512xf32>, vector<8x512xf32>, vector<8x512xf32> -> vector<72x512xf32>
    %54 = arith.truncf %53 : vector<72x512xf32> to vector<72x512xbf16>
    %c0_25 = arith.constant 0 : index
    %c0_26 = arith.constant 0 : index
    %55 = vector.load %arg3[%c0_25, %c0_26] : memref<8x72xbf16, #tpu.memory_space<vmem>>, vector<8x72xbf16>
    %cst_27 = arith.constant dense<0.000000e+00> : vector<8x512xf32>
    %56 = tpu.matmul %55, %54, %cst_27 {dimension_numbers = #tpu.dot_dimension_numbers<[1], [0], [0], [1], [0, 0, 1, 1], [], []>} : vector<8x72xbf16>, vector<72x512xbf16>, vector<8x512xf32> -> vector<8x512xf32>
    %c8_28 = arith.constant 8 : index
    %c0_29 = arith.constant 0 : index
    %57 = vector.load %arg5[%c8_28, %c0_29] : memref<48x1xf32, #tpu.memory_space<vmem>>, vector<8x1xf32>
    %58 = vector.broadcast %57 : vector<8x1xf32> to vector<8x512xf32>
    %59 = arith.addf %56, %58 : vector<8x512xf32>
    %cst_30 = arith.constant 0.000000e+00 : f32
    %60 = vector.broadcast %cst_30 : f32 to vector<8x512xf32>
    %61 = arith.maximumf %59, %60 : vector<8x512xf32>
    %c0_31 = arith.constant 0 : index
    %c0_32 = arith.constant 0 : index
    %62 = vector.load %arg4[%c0_31, %c0_32] : memref<32x8xbf16, #tpu.memory_space<vmem>>, vector<32x8xbf16>
    %63 = arith.truncf %61 : vector<8x512xf32> to vector<8x512xbf16>
    %cst_33 = arith.constant dense<0.000000e+00> : vector<32x512xf32>
    %64 = tpu.matmul %62, %63, %cst_33 {dimension_numbers = #tpu.dot_dimension_numbers<[1], [0], [0], [1], [0, 0, 1, 1], [], []>} : vector<32x8xbf16>, vector<8x512xbf16>, vector<32x512xf32> -> vector<32x512xf32>
    %c16 = arith.constant 16 : index
    %c0_34 = arith.constant 0 : index
    %65 = vector.load %arg5[%c16, %c0_34] : memref<48x1xf32, #tpu.memory_space<vmem>>, vector<32x1xf32>
    %66 = vector.broadcast %65 : vector<32x1xf32> to vector<32x512xf32>
    %67 = arith.addf %64, %66 : vector<32x512xf32>
    %c0_35 = arith.constant 0 : index
    %c0_36 = arith.constant 0 : index
    %68 = vector.load %arg1[%c0_35, %c0_36] : memref<32x512xf32, #tpu.memory_space<vmem>>, vector<32x512xf32>
    %69 = arith.addf %67, %68 : vector<32x512xf32>
    %cst_37 = arith.constant 0.000000e+00 : f32
    %70 = vector.broadcast %cst_37 : f32 to vector<32x512xf32>
    %71 = arith.maximumf %69, %70 : vector<32x512xf32>
    %c0_38 = arith.constant 0 : index
    %c0_39 = arith.constant 0 : index
    %72 = vector.load %arg7[%c0_38, %c0_39] : memref<32x512xf32, #tpu.memory_space<vmem>>, vector<32x512xf32>
    tpu.vector_store %arg7[%c0_38, %c0_39], %71 {strides = array<i32>} : memref<32x512xf32, #tpu.memory_space<vmem>>, vector<32x512xf32>,
    return
  }
  func.func @transform_0(%arg0: i32) -> (i32, i32) {
    %c0_i32 = arith.constant 0 : i32
    %c0_i32_0 = arith.constant 0 : i32
    return %c0_i32, %arg0 : i32, i32
  }
  func.func @transform_1(%arg0: i32) -> (i32, i32) {
    %c0_i32 = arith.constant 0 : i32
    %c0_i32_0 = arith.constant 0 : i32
    %c0_i32_1 = arith.constant 0 : i32
    return %c0_i32, %c0_i32_0 : i32, i32
  }
  func.func @transform_2(%arg0: i32) -> (i32, i32) {
    %c0_i32 = arith.constant 0 : i32
    %c0_i32_0 = arith.constant 0 : i32
    %c0_i32_1 = arith.constant 0 : i32
    return %c0_i32, %c0_i32_0 : i32, i32
  }
  func.func @transform_3(%arg0: i32) -> (i32, i32) {
    %c0_i32 = arith.constant 0 : i32
    %c0_i32_0 = arith.constant 0 : i32
    %c0_i32_1 = arith.constant 0 : i32
    return %c0_i32, %c0_i32_0 : i32, i32
  }
  func.func @transform_4(%arg0: i32) -> (i32, i32) {
    %c0_i32 = arith.constant 0 : i32
    %c0_i32_0 = arith.constant 0 : i32
    %c0_i32_1 = arith.constant 0 : i32
    return %c0_i32, %c0_i32_0 : i32, i32
  }
  func.func @transform_5(%arg0: i32) -> (i32, i32, i32) {
    %c0_i32 = arith.constant 0 : i32
    %c0_i32_0 = arith.constant 0 : i32
    %c0_i32_1 = arith.constant 0 : i32
    %c0_i32_2 = arith.constant 0 : i32
    return %c0_i32, %c0_i32_0, %c0_i32_1 : i32, i32, i32
  }
  func.func @transform_6(%arg0: i32) -> (i32, i32) {
    %c0_i32 = arith.constant 0 : i32
    %c0_i32_0 = arith.constant 0 : i32
    return %c0_i32, %arg0 : i32, i32
  }
}

</mosaic_0001>

<llo_original>
// kernel: bottleneck_pallas.1
$region0: #{bottleneck_pallas.1}
  #allocation0 [shape = 'u32[]', space=smem, size = 0x4, offset = 0x4, fixed_abs, tag = 'smem constant byte address 0x4 - core index']
  #allocation1 [shape = 'u32[72,128]{1,0:T(1,128)}', space=vmem, size = 0x9000, scoped, tag = 'internal scratch']
  %s0 = inlined_call_operand.vmem [shape: f32[32,1024], index: 0, kind: input, shape index: {}]
  %s1 = inlined_call_operand.vmem [shape: bf16[8,32], index: 1, kind: input, shape index: {}]
  %s2 = inlined_call_operand.vmem [shape: bf16[8,72], index: 2, kind: input, shape index: {}]
  %s3 = inlined_call_operand.vmem [shape: bf16[32,8], index: 3, kind: input, shape index: {}]
  %s4 = inlined_call_operand.vmem [shape: f32[48,1], index: 4, kind: input, shape index: {}]
  %s5 = inlined_call_operand.vmem [shape: f32[9,1,512], index: 5, kind: input, shape index: {}]
  %s6 = inlined_call_operand.vmem [shape: f32[32,1024], index: 6, kind: output, shape index: {}]
  %s7 = sld [smem:[#allocation0]]
  $region99: #{bottleneck_pallas.1} parent=0
    _
  %s9 = ssub.s32 1, %s7
  %s10 = scalar_select 0, %s9, %s7
  $region1: #{bottleneck_pallas.1} parent=0
    #allocation2 [shape = 'u8[131072]{0}', space=vmem, size = 0x20000, scoped, tag = 'input window, operand 0']
    #allocation3 [shape = 'u8[131072]{0}', space=vmem, size = 0x20000, scoped, tag = 'output window, operand 0']
    loop: start=0, step=1, limit=4
    $region2: #{bottleneck_pallas.1} parent=1 // loop_pre_header
      _
    $region3: #{bottleneck_pallas.1} parent=1 // loop_header
      %s12 = sphi 0, %s16
      %p13 = scmp.ge.s32.totalorder %s12, 4
      %s22 = sphi 0, %s24
      %s25 = sphi 0, %s22
      %s26 = sphi 0, %s25
      %s42 = sphi 0, %s26
      %s46 = sphi 0, %s46
      %s48 = sphi 0, %s46
      %s49 = sphi 0, %s48
      %s63 = sphi 0, %s49
      %s67 = sphi 0, %s67
      %s69 = sphi 0, %s67
      %s70 = sphi 0, %s69
      %s84 = sphi 0, %s70
      %s88 = sphi 0, %s88
      %s90 = sphi 0, %s88
      %s91 = sphi 0, %s90
      %s105 = sphi 0, %s91
      %s109 = sphi 0, %s109
      %s111 = sphi 0, %s109
      %s112 = sphi 0, %s111
      %s126 = sphi 0, %s112
      %s130 = sphi 0, %s130
      %s132 = sphi 0, %s130
      %s133 = sphi 0, %s132
      %s147 = sphi 0, %s133
      %s153 = sphi 0, %s155
      %s156 = sphi 0, %s153
      %s157 = sphi 0, %s156
      %s173 = sphi 0, %s157
    $region4: #{bottleneck_pallas.1} parent=1 // loop_header_branch
      %15 = sbr.rel (%p13) target = $region8
    $region5: #{bottleneck_pallas.1} parent=1 // loop_body
      %s17 = ssub.s32 %s12, 1
      %s18 = ssub.s32 %s12, 2
      %s19 = sadd.s32 %s12, 1
      %s20 = ssub.s32 %s12, %s19
      %p21 = scmp.eq.s32.totalorder %s20, 0
      %s23 = sadd.s32 %s22, 1
      %s24 = scalar_select %p21, %s22, %s23
      %p27 = pneg %p21
      %p28 = scmp.eq.s32.totalorder %s12, 1
      %p29 = por %p27, %p28
      %p30 = scmp.ne.s32.totalorder %s22, %s25
      %p31 = scmp.eq.s32.totalorder %s12, 0
      %p32 = por %p30, %p31
      %p33 = scmp.ne.s32.totalorder %s22, %s25
      %p34 = scmp.eq.s32.totalorder %s17, 1
      %p35 = por %p33, %p34
      %p36 = scmp.ne.s32.totalorder %s25, %s26
      %p37 = scmp.eq.s32.totalorder %s17, 0
      %p38 = por %p36, %p37
      %p39 = scmp.ne.s32.totalorder %s25, %s26
      %p40 = scmp.eq.s32.totalorder %s18, 1
      %p41 = por %p39, %p40
      %p43 = scmp.ne.s32.totalorder %s26, %s42
      %p44 = scmp.eq.s32.totalorder %s18, 0
      %p45 = por %p43, %p44
      %s47 = sadd.s32 %s46, 1
      %p50 = scmp.eq.s32.totalorder %s12, 1
      %p51 = scmp.ne.s32.totalorder %s46, %s48
      %p52 = scmp.eq.s32.totalorder %s12, 0
      %p53 = por %p51, %p52
      %p54 = scmp.ne.s32.totalorder %s46, %s48
      %p55 = scmp.eq.s32.totalorder %s17, 1
      %p56 = por %p54, %p55
      %p57 = scmp.ne.s32.totalorder %s48, %s49
      %p58 = scmp.eq.s32.totalorder %s17, 0
      %p59 = por %p57, %p58
      %p60 = scmp.ne.s32.totalorder %s48, %s49
      %p61 = scmp.eq.s32.totalorder %s18, 1
      %p62 = por %p60, %p61
      %p64 = scmp.ne.s32.totalorder %s49, %s63
      %p65 = scmp.eq.s32.totalorder %s18, 0
      %p66 = por %p64, %p65
      %s68 = sadd.s32 %s67, 1
      %p71 = scmp.eq.s32.totalorder %s12, 1
      %p72 = scmp.ne.s32.totalorder %s67, %s69
      %p73 = scmp.eq.s32.totalorder %s12, 0
      %p74 = por %p72, %p73
      %p75 = scmp.ne.s32.totalorder %s67, %s69
      %p76 = scmp.eq.s32.totalorder %s17, 1
      %p77 = por %p75, %p76
      %p78 = scmp.ne.s32.totalorder %s69, %s70
      %p79 = scmp.eq.s32.totalorder %s17, 0
      %p80 = por %p78, %p79
      %p81 = scmp.ne.s32.totalorder %s69, %s70
      %p82 = scmp.eq.s32.totalorder %s18, 1
      %p83 = por %p81, %p82
      %p85 = scmp.ne.s32.totalorder %s70, %s84
      %p86 = scmp.eq.s32.totalorder %s18, 0
      %p87 = por %p85, %p86
      %s89 = sadd.s32 %s88, 1
      %p92 = scmp.eq.s32.totalorder %s12, 1
      %p93 = scmp.ne.s32.totalorder %s88, %s90
      %p94 = scmp.eq.s32.totalorder %s12, 0
      %p95 = por %p93, %p94
      %p96 = scmp.ne.s32.totalorder %s88, %s90
      %p97 = scmp.eq.s32.totalorder %s17, 1
      %p98 = por %p96, %p97
      %p99 = scmp.ne.s32.totalorder %s90, %s91
      %p100 = scmp.eq.s32.totalorder %s17, 0
      %p101 = por %p99, %p100
      %p102 = scmp.ne.s32.totalorder %s90, %s91
      %p103 = scmp.eq.s32.totalorder %s18, 1
      %p104 = por %p102, %p103
      %p106 = scmp.ne.s32.totalorder %s91, %s105
      %p107 = scmp.eq.s32.totalorder %s18, 0
      %p108 = por %p106, %p107
      %s110 = sadd.s32 %s109, 1
      %p113 = scmp.eq.s32.totalorder %s12, 1
      %p114 = scmp.ne.s32.totalorder %s109, %s111
      %p115 = scmp.eq.s32.totalorder %s12, 0
      %p116 = por %p114, %p115
      %p117 = scmp.ne.s32.totalorder %s109, %s111
      %p118 = scmp.eq.s32.totalorder %s17, 1
      %p119 = por %p117, %p118
      %p120 = scmp.ne.s32.totalorder %s111, %s112
      %p121 = scmp.eq.s32.totalorder %s17, 0
      %p122 = por %p120, %p121
      %p123 = scmp.ne.s32.totalorder %s111, %s112
      %p124 = scmp.eq.s32.totalorder %s18, 1
      %p125 = por %p123, %p124
      %p127 = scmp.ne.s32.totalorder %s112, %s126
      %p128 = scmp.eq.s32.totalorder %s18, 0
      %p129 = por %p127, %p128
      %s131 = sadd.s32 %s130, 1
      %p134 = scmp.eq.s32.totalorder %s12, 1
      %p135 = scmp.ne.s32.totalorder %s130, %s132
      %p136 = scmp.eq.s32.totalorder %s12, 0
      %p137 = por %p135, %p136
      %p138 = scmp.ne.s32.totalorder %s130, %s132
      %p139 = scmp.eq.s32.totalorder %s17, 1
      %p140 = por %p138, %p139
      %p141 = scmp.ne.s32.totalorder %s132, %s133
      %p142 = scmp.eq.s32.totalorder %s17, 0
      %p143 = por %p141, %p142
      %p144 = scmp.ne.s32.totalorder %s132, %s133
      %p145 = scmp.eq.s32.totalorder %s18, 1
      %p146 = por %p144, %p145
      %p148 = scmp.ne.s32.totalorder %s133, %s147
      %p149 = scmp.eq.s32.totalorder %s18, 0
      %p150 = por %p148, %p149
      %s151 = ssub.s32 %s12, %s19
      %p152 = scmp.eq.s32.totalorder %s151, 0
      %s154 = sadd.s32 %s153, 1
      %s155 = scalar_select %p152, %s153, %s154
      %p158 = pneg %p152
      %p159 = scmp.eq.s32.totalorder %s12, 1
      %p160 = por %p158, %p159
      %p161 = scmp.ne.s32.totalorder %s153, %s156
      %p162 = scmp.eq.s32.totalorder %s12, 0
      %p163 = por %p161, %p162
      %p164 = scmp.ne.s32.totalorder %s153, %s156
      %p165 = scmp.eq.s32.totalorder %s17, 1
      %p166 = por %p164, %p165
      %p167 = scmp.ne.s32.totalorder %s156, %s157
      %p168 = scmp.eq.s32.totalorder %s17, 0
      %p169 = por %p167, %p168
      %p170 = scmp.ne.s32.totalorder %s156, %s157
      %p171 = scmp.eq.s32.totalorder %s18, 1
      %p172 = por %p170, %p171
      %p174 = scmp.ne.s32.totalorder %s157, %s173
      %p175 = scmp.eq.s32.totalorder %s18, 0
      %p176 = por %p174, %p175
      %p177 = scmp.le.s32.totalorder 1, %s12
      %p178 = scmp.lt.s32.totalorder %s12, 3
      %p179 = pnand %p177, %p178
      %p180 = pneg %p179
      // Predicated region
      $region9: #{bottleneck_pallas.1} parent=5 // pred_check
        _
      $region10: #{bottleneck_pallas.1} parent=5 // pred_check_branch
        %182 = sbr.rel (%p179) target = $region12
      $region11: #{bottleneck_pallas.1} parent=5 // pred_region
        %s183 = ssub.s32 %s12, 1
        // Predicated region
        $region13: #{bottleneck_pallas.1} parent=11 // pred_check
          %p184 = pneg %p59
        $region14: #{bottleneck_pallas.1} parent=11 // pred_check_branch
          %186 = sbr.rel (%p184) target = $region16
        $region15: #{bottleneck_pallas.1} parent=11 // pred_region
          _
        $region16: #{bottleneck_pallas.1} parent=11 // pred_fallthru
          _
        // Predicated region
        $region17: #{bottleneck_pallas.1} parent=11 // pred_check
          %p187 = pneg %p80
        $region18: #{bottleneck_pallas.1} parent=11 // pred_check_branch
          %189 = sbr.rel (%p187) target = $region20
        $region19: #{bottleneck_pallas.1} parent=11 // pred_region
          _
        $region20: #{bottleneck_pallas.1} parent=11 // pred_fallthru
          _
        // Predicated region
        $region21: #{bottleneck_pallas.1} parent=11 // pred_check
          %p190 = pneg %p101
        $region22: #{bottleneck_pallas.1} parent=11 // pred_check_branch
          %192 = sbr.rel (%p190) target = $region24
        $region23: #{bottleneck_pallas.1} parent=11 // pred_region
          _
        $region24: #{bottleneck_pallas.1} parent=11 // pred_fallthru
          _
        // Predicated region
        $region25: #{bottleneck_pallas.1} parent=11 // pred_check
          %p193 = pneg %p122
        $region26: #{bottleneck_pallas.1} parent=11 // pred_check_branch
          %195 = sbr.rel (%p193) target = $region28
        $region27: #{bottleneck_pallas.1} parent=11 // pred_region
          _
        $region28: #{bottleneck_pallas.1} parent=11 // pred_fallthru
          _
        // Predicated region
        $region29: #{bottleneck_pallas.1} parent=11 // pred_check
          %p196 = pneg %p143
        $region30: #{bottleneck_pallas.1} parent=11 // pred_check_branch
          %198 = sbr.rel (%p196) target = $region32
        $region31: #{bottleneck_pallas.1} parent=11 // pred_region
          _
        $region32: #{bottleneck_pallas.1} parent=11 // pred_fallthru
          _
      $region12: #{bottleneck_pallas.1} parent=5 // pred_fallthru
        _
      %p199 = scmp.lt.s32.totalorder %s12, 2
      // Predicated region
      $region33: #{bottleneck_pallas.1} parent=5 // pred_check
        %p200 = pneg %p199
      $region34: #{bottleneck_pallas.1} parent=5 // pred_check_branch
        %202 = sbr.rel (%p200) target = $region36
      $region35: #{bottleneck_pallas.1} parent=5 // pred_region
        // Predicated region
        $region37: #{bottleneck_pallas.1} parent=35 // pred_check
          %p203 = pneg %p32
        $region38: #{bottleneck_pallas.1} parent=35 // pred_check_branch
          %205 = sbr.rel (%p203) target = $region40
        $region39: #{bottleneck_pallas.1} parent=35 // pred_region
          %s206 = sand.u32 %s22, 1
          %s207 = sand.u32 %s22, 1
          %s208 = smul.addr %s207, 128
          %s209 = scalar_lea.vmem [#allocation2], %s208
          %s210 = smul.u32 4, %s12
          %s211 = smul.addr %s210, 8
          %s212 = scalar_lea.vmem %s0, %s211
          // Predicated region
          $region41: #{bottleneck_pallas.1} parent=39 // pred_check
            _
          $region42: #{bottleneck_pallas.1} parent=39 // pred_check_branch
            %214 = sbr.rel (0) target = $region44
          $region43: #{bottleneck_pallas.1} parent=39 // pred_region
            // Predicated region
            $region45: #{bottleneck_pallas.1} parent=43 // pred_check
              _
            $region46: #{bottleneck_pallas.1} parent=43 // pred_check_branch
              %216 = sbr.rel (0) target = $region48
            $region47: #{bottleneck_pallas.1} parent=43 // pred_region
              loop: start=0, step=1, limit=1
              $region49: #{bottleneck_pallas.1} parent=47 // loop_pre_header
                _
              $region50: #{bottleneck_pallas.1} parent=47 // loop_header
                %s218 = sphi 0, %s222
                %p219 = scmp.ge.s32.totalorder %s218, 1
                %s223 = sphi %s212, %s212
                %s224 = sphi %s209, %s209
              $region51: #{bottleneck_pallas.1} parent=47 // loop_header_branch
                %221 = sbr.rel (%p219) target = $region55
              $region52: #{bottleneck_pallas.1} parent=47 // loop_body
                %v225 = vld [vmem:[%s223] sm:$0xff]
                %226 = vst [vmem:[%s224] sm:$0xff] %v225
                %v227 = vld [vmem:[%s223 + $0x8] sm:$0xff]
                %228 = vst [vmem:[%s224 + $0x8] sm:$0xff] %v227
                %v229 = vld [vmem:[%s223 + $0x10] sm:$0xff]
                %230 = vst [vmem:[%s224 + $0x10] sm:$0xff] %v229
                %v231 = vld [vmem:[%s223 + $0x18] sm:$0xff]
                %232 = vst [vmem:[%s224 + $0x18] sm:$0xff] %v231
                %v233 = vld [vmem:[%s223 + $0x40] sm:$0xff]
                %234 = vst [vmem:[%s224 + $0x20] sm:$0xff] %v233
                %v235 = vld [vmem:[%s223 + $0x48] sm:$0xff]
                %236 = vst [vmem:[%s224 + $0x28] sm:$0xff] %v235
                %v237 = vld [vmem:[%s223 + $0x50] sm:$0xff]
                %238 = vst [vmem:[%s224 + $0x30] sm:$0xff] %v237
                %v239 = vld [vmem:[%s223 + $0x58] sm:$0xff]
                %240 = vst [vmem:[%s224 + $0x38] sm:$0xff] %v239
                %v241 = vld [vmem:[%s223 + $0x80] sm:$0xff]
                %242 = vst [vmem:[%s224 + $0x40] sm:$0xff] %v241
                %v243 = vld [vmem:[%s223 + $0x88] sm:$0xff]
                %244 = vst [vmem:[%s224 + $0x48] sm:$0xff] %v243
                %v245 = vld [vmem:[%s223 + $0x90] sm:$0xff]
                %246 = vst [vmem:[%s224 + $0x50] sm:$0xff] %v245
                %v247 = vld [vmem:[%s223 + $0x98] sm:$0xff]
                %248 = vst [vmem:[%s224 + $0x58] sm:$0xff] %v247
                %v249 = vld [vmem:[%s223 + $0xc0] sm:$0xff]
                %250 = vst [vmem:[%s224 + $0x60] sm:$0xff] %v249
                %v251 = vld [vmem:[%s223 + $0xc8] sm:$0xff]
                %252 = vst [vmem:[%s224 + $0x68] sm:$0xff] %v251
                %v253 = vld [vmem:[%s223 + $0xd0] sm:$0xff]
                %254 = vst [vmem:[%s224 + $0x70] sm:$0xff] %v253
                %v255 = vld [vmem:[%s223 + $0xd8] sm:$0xff]
                %256 = vst [vmem:[%s224 + $0x78] sm:$0xff] %v255
              $region53: #{bottleneck_pallas.1} parent=47 // loop_footer
                %s222 = sadd.s32 1, %s218
              $region54: #{bottleneck_pallas.1} parent=47 // loop_footer_branch
                %217 = sbr.rel target = $region50
              $region55: #{bottleneck_pallas.1} parent=47 // loop_exit
                _
            $region48: #{bottleneck_pallas.1} parent=43 // pred_fallthru
              _
            // Predicated region
            $region56: #{bottleneck_pallas.1} parent=43 // pred_check
              _
            $region57: #{bottleneck_pallas.1} parent=43 // pred_check_branch
              %258 = sbr.rel target = $region59
            $region58: #{bottleneck_pallas.1} parent=43 // pred_region
              _
            $region59: #{bottleneck_pallas.1} parent=43 // pred_fallthru
              _
          $region44: #{bottleneck_pallas.1} parent=39 // pred_fallthru
            _
          %259 = vnop
        $region40: #{bottleneck_pallas.1} parent=35 // pred_fallthru
          _
      $region36: #{bottleneck_pallas.1} parent=5 // pred_fallthru
        _
      %p260 = scmp.le.s32.totalorder 1, %s12
      %p261 = scmp.lt.s32.totalorder %s12, 3
      %p262 = pnand %p260, %p261
      %p263 = pneg %p262
      // Predicated region
      $region60: #{bottleneck_pallas.1} parent=5 // pred_check
        _
      $region61: #{bottleneck_pallas.1} parent=5 // pred_check_branch
        %265 = sbr.rel (%p262) target = $region63
      $region62: #{bottleneck_pallas.1} parent=5 // pred_region
        %s266 = ssub.s32 %s12, 1
        %s267 = sand.u32 %s25, 1
        %s268 = sand.u32 %s25, 1
        %s269 = smul.addr %s268, 128
        %s270 = scalar_lea.vmem [#allocation2], %s269
        // Predicated region
        $region64: #{bottleneck_pallas.1} parent=62 // pred_check
          %p271 = pneg %p38
        $region65: #{bottleneck_pallas.1} parent=62 // pred_check_branch
          %273 = sbr.rel (%p271) target = $region67
        $region66: #{bottleneck_pallas.1} parent=62 // pred_region
          _
        $region67: #{bottleneck_pallas.1} parent=62 // pred_fallthru
          _
        %s274 = sand.u32 %s25, 1
        %s275 = sand.u32 %s25, 1
        %s276 = smul.addr %s275, 128
        %s277 = scalar_lea.vmem [#allocation2], %s276
        %p278 = pneg %p38
        %p279 = pneg %p35
        %p280 = pneg %p59
        %p281 = pneg %p56
        %p282 = pneg %p80
        %p283 = pneg %p77
        %p284 = pneg %p101
        %p285 = pneg %p98
        %p286 = pneg %p122
        %p287 = pneg %p119
        %p288 = pneg %p143
        %p289 = pneg %p140
        %p290 = pneg %p169
        %p291 = pneg %p166
        %s292 = sand.u32 %s156, 1
        %s293 = sand.u32 %s156, 1
        %s294 = smul.addr %s293, 128
        %s295 = scalar_lea.vmem [#allocation3], %s294
        %s296 = smul.u32 4, %s17
        %s297 = smul.u32 4, %s17
        %v299 = vld [vmem:[%s270] sm:$0xff]
        %v300 = vld [vmem:[%s270 + $0x8] sm:$0xff]
        %v301 = vld [vmem:[%s270 + $0x10] sm:$0xff]
        %v302 = vld [vmem:[%s270 + $0x18] sm:$0xff]
        %v303 = vld [vmem:[%s270 + $0x20] sm:$0xff]
        %v304 = vld [vmem:[%s270 + $0x28] sm:$0xff]
        %v305 = vld [vmem:[%s270 + $0x30] sm:$0xff]
        %v306 = vld [vmem:[%s270 + $0x38] sm:$0xff]
        %v307 = vld [vmem:[%s270 + $0x40] sm:$0xff]
        %v308 = vld [vmem:[%s270 + $0x48] sm:$0xff]
        %v309 = vld [vmem:[%s270 + $0x50] sm:$0xff]
        %v310 = vld [vmem:[%s270 + $0x58] sm:$0xff]
        %v311 = vld [vmem:[%s270 + $0x60] sm:$0xff]
        %v312 = vld [vmem:[%s270 + $0x68] sm:$0xff]
        %v313 = vld [vmem:[%s270 + $0x70] sm:$0xff]
        %v314 = vld [vmem:[%s270 + $0x78] sm:$0xff]
        %v315 = vpack.c.bf16 %v303, %v299
        %v316 = vpack.c.bf16 %v304, %v300
        %v317 = vpack.c.bf16 %v305, %v301
        %v318 = vpack.c.bf16 %v306, %v302
        %v319 = vpack.c.bf16 %v311, %v307
        %v320 = vpack.c.bf16 %v312, %v308
        %v321 = vpack.c.bf16 %v313, %v309
        %v322 = vpack.c.bf16 %v314, %v310
        %v323 = vld [vmem:[%s1] sm:$0xf]
        %v324 = vld [vmem:[%s4] sm:$0xff]
        %326 = vset.pattern.permute.xlu0 0
        %327 = vperm.xlu0 %326, %v324
        %v328 = vpop.permute.xlu0 %327
        %vm330 = vcmask 261120
        %v332 = vsel %vm330, %v323, 0
        %334 = vmatpush.bf16.msra.mxu0 0
        %335 = vmatpush.bf16.msra.mxu0 0
        %336 = vmatpush.bf16.msra.mxu0 0
        %337 = vmatpush.bf16.msra.mxu0 0
        %338 = vmatpush.bf16.msra.mxu0 0
        %339 = vmatpush.bf16.msra.mxu0 0
        %340 = vmatpush.bf16.msra.mxu0 %v319
        %341 = vmatpush.bf16.msra.mxu0 %v315
        %342 = vmatmul.bf16.gmra.mxu0 %v332
        %v343 = vpop.f32.mrf.mxu0
        %v344 = vadd.f32 %v328, %v343
        %v345 = vpop.f32.mrf.mxu0
        %346 = vdwg.mxu0
        %347 = vmatpush.bf16.msra.mxu0 0
        %348 = vmatpush.bf16.msra.mxu0 0
        %349 = vmatpush.bf16.msra.mxu0 0
        %350 = vmatpush.bf16.msra.mxu0 0
        %351 = vmatpush.bf16.msra.mxu0 0
        %352 = vmatpush.bf16.msra.mxu0 0
        %353 = vmatpush.bf16.msra.mxu0 %v320
        %354 = vmatpush.bf16.msra.mxu0 %v316
        %355 = vmatmul.bf16.gmra.mxu0 %v332
        %v356 = vpop.f32.mrf.mxu0
        %v357 = vadd.f32 %v328, %v356
        %v358 = vpop.f32.mrf.mxu0
        %359 = vdwg.mxu0
        %360 = vmatpush.bf16.msra.mxu0 0
        %361 = vmatpush.bf16.msra.mxu0 0
        %362 = vmatpush.bf16.msra.mxu0 0
        %363 = vmatpush.bf16.msra.mxu0 0
        %364 = vmatpush.bf16.msra.mxu0 0
        %365 = vmatpush.bf16.msra.mxu0 0
        %366 = vmatpush.bf16.msra.mxu0 %v321
        %367 = vmatpush.bf16.msra.mxu0 %v317
        %368 = vmatmul.bf16.gmra.mxu0 %v332
        %v369 = vpop.f32.mrf.mxu0
        %v370 = vadd.f32 %v328, %v369
        %v371 = vpop.f32.mrf.mxu0
        %372 = vdwg.mxu0
        %373 = vmatpush.bf16.msra.mxu0 0
        %374 = vmatpush.bf16.msra.mxu0 0
        %375 = vmatpush.bf16.msra.mxu0 0
        %376 = vmatpush.bf16.msra.mxu0 0
        %377 = vmatpush.bf16.msra.mxu0 0
        %378 = vmatpush.bf16.msra.mxu0 0
        %379 = vmatpush.bf16.msra.mxu0 %v322
        %380 = vmatpush.bf16.msra.mxu0 %v318
        %381 = vmatmul.bf16.gmra.mxu0 %v332
        %v382 = vpop.f32.mrf.mxu0
        %v383 = vadd.f32 %v328, %v382
        %v384 = vpop.f32.mrf.mxu0
        %385 = vdwg.mxu0
        %v386 = vmax.f32 %v344, 0.0
        %v387 = vmax.f32 %v357, 0.0
        %v388 = vmax.f32 %v370, 0.0
        %v389 = vmax.f32 %v383, 0.0
        %390 = vrot.lane.b32.xlu0 %v386, 17
        %v391 = vpop.permute.xlu0 %390
        %392 = vrot.lane.b32.xlu0 %v387, 17
        %v393 = vpop.permute.xlu0 %392
        %394 = vrot.lane.b32.xlu0 %v388, 17
        %v395 = vpop.permute.xlu0 %394
        %396 = vrot.lane.b32.xlu0 %v389, 17
        %v397 = vpop.permute.xlu0 %396
        %v398 = vlaneseq
        %v399 = vand.u32 %v398, 127
        %vm400 = vcmp.lt.s32.totalorder %v399, 17
        %v401 = vsel %vm400, %v395, %v397
        %v402 = vsel %vm400, %v393, %v395
        %v403 = vsel %vm400, %v391, %v393
        %v404 = vsel %vm400, %v397, %v391
        %v405 = vld [vmem:[%s5] sm:$0xf]
        %v407 = vperm.slane %v405, 0
        %v408 = vperm.slane %v405, 1
        %v409 = vperm.slane %v405, 2
        %v410 = vperm.slane %v405, 3
        %v415 = vmul.f32 %v404, %v407
        %v416 = vmul.f32 %v403, %v408
        %v417 = vmul.f32 %v402, %v409
        %v418 = vmul.f32 %v401, %v410
        %419 = vrot.lane.b32.xlu0 %v386, 16
        %v420 = vpop.permute.xlu0 %419
        %421 = vrot.lane.b32.xlu0 %v387, 16
        %v422 = vpop.permute.xlu0 %421
        %423 = vrot.lane.b32.xlu0 %v388, 16
        %v424 = vpop.permute.xlu0 %423
        %425 = vrot.lane.b32.xlu0 %v389, 16
        %v426 = vpop.permute.xlu0 %425
        %vm427 = vcmp.lt.s32.totalorder %v399, 16
        %v428 = vsel %vm427, %v424, %v426
        %v429 = vsel %vm427, %v422, %v424
        %v430 = vsel %vm427, %v420, %v422
        %v431 = vsel %vm427, %v426, %v420
        %s432 = scalar_lea.vmem %s5, 4
        %v433 = vld [vmem:[%s432] sm:$0xf]
        %v435 = vperm.slane %v433, 0
        %v436 = vperm.slane %v433, 1
        %v437 = vperm.slane %v433, 2
        %v438 = vperm.slane %v433, 3
        %v443 = vmul.f32 %v431, %v435
        %v444 = vmul.f32 %v430, %v436
        %v445 = vmul.f32 %v429, %v437
        %v446 = vmul.f32 %v428, %v438
        %447 = vrot.lane.b32.xlu0 %v386, 15
        %v448 = vpop.permute.xlu0 %447
        %449 = vrot.lane.b32.xlu0 %v387, 15
        %v450 = vpop.permute.xlu0 %449
        %451 = vrot.lane.b32.xlu0 %v388, 15
        %v452 = vpop.permute.xlu0 %451
        %453 = vrot.lane.b32.xlu0 %v389, 15
        %v454 = vpop.permute.xlu0 %453
        %vm455 = vcmp.lt.s32.totalorder %v399, 15
        %v456 = vsel %vm455, %v452, %v454
        %v457 = vsel %vm455, %v450, %v452
        %v458 = vsel %vm455, %v448, %v450
        %v459 = vsel %vm455, %v454, %v448
        %s460 = scalar_lea.vmem %s5, 8
        %v461 = vld [vmem:[%s460] sm:$0xf]
        %v463 = vperm.slane %v461, 0
        %v464 = vperm.slane %v461, 1
        %v465 = vperm.slane %v461, 2
        %v466 = vperm.slane %v461, 3
        %v471 = vmul.f32 %v459, %v463
        %v472 = vmul.f32 %v458, %v464
        %v473 = vmul.f32 %v457, %v465
        %v474 = vmul.f32 %v456, %v466
        %475 = vrot.lane.b32.xlu0 %v386, 1
        %v476 = vpop.permute.xlu0 %475
        %477 = vrot.lane.b32.xlu0 %v387, 1
        %v478 = vpop.permute.xlu0 %477
        %479 = vrot.lane.b32.xlu0 %v388, 1
        %v480 = vpop.permute.xlu0 %479
        %481 = vrot.lane.b32.xlu0 %v389, 1
        %v482 = vpop.permute.xlu0 %481
        %vm483 = vcmp.lt.s32.totalorder %v399, 1
        %v484 = vsel %vm483, %v480, %v482
        %v485 = vsel %vm483, %v478, %v480
        %v486 = vsel %vm483, %v476, %v478
        %v487 = vsel %vm483, %v482, %v476
        %s488 = scalar_lea.vmem %s5, 12
        %v489 = vld [vmem:[%s488] sm:$0xf]
        %v491 = vperm.slane %v489, 0
        %v492 = vperm.slane %v489, 1
        %v493 = vperm.slane %v489, 2
        %v494 = vperm.slane %v489, 3
        %v499 = vmul.f32 %v487, %v491
        %v500 = vmul.f32 %v486, %v492
        %v501 = vmul.f32 %v485, %v493
        %v502 = vmul.f32 %v484, %v494
        %s503 = scalar_lea.vmem %s5, 16
        %v504 = vld [vmem:[%s503] sm:$0xf]
        %v506 = vperm.slane %v504, 0
        %v507 = vperm.slane %v504, 1
        %v508 = vperm.slane %v504, 2
        %v509 = vperm.slane %v504, 3
        %v514 = vmul.f32 %v386, %v506
        %v515 = vmul.f32 %v387, %v507
        %v516 = vmul.f32 %v388, %v508
        %v517 = vmul.f32 %v389, %v509
        %518 = vrot.lane.b32.xlu0 %v386, 127
        %v519 = vpop.permute.xlu0 %518
        %520 = vrot.lane.b32.xlu0 %v387, 127
        %v521 = vpop.permute.xlu0 %520
        %522 = vrot.lane.b32.xlu0 %v388, 127
        %v523 = vpop.permute.xlu0 %522
        %524 = vrot.lane.b32.xlu0 %v389, 127
        %v525 = vpop.permute.xlu0 %524
        %vm526 = vcmp.lt.s32.totalorder %v399, 127
        %v527 = vsel %vm526, %v523, %v525
        %v528 = vsel %vm526, %v521, %v523
        %v529 = vsel %vm526, %v519, %v521
        %v530 = vsel %vm526, %v525, %v519
        %s531 = scalar_lea.vmem %s5, 20
        %v532 = vld [vmem:[%s531] sm:$0xf]
        %v534 = vperm.slane %v532, 0
        %v535 = vperm.slane %v532, 1
        %v536 = vperm.slane %v532, 2
        %v537 = vperm.slane %v532, 3
        %v542 = vmul.f32 %v529, %v534
        %v543 = vmul.f32 %v528, %v535
        %v544 = vmul.f32 %v527, %v536
        %v545 = vmul.f32 %v530, %v537
        %546 = vrot.lane.b32.xlu0 %v386, 113
        %v547 = vpop.permute.xlu0 %546
        %548 = vrot.lane.b32.xlu0 %v387, 113
        %v549 = vpop.permute.xlu0 %548
        %550 = vrot.lane.b32.xlu0 %v388, 113
        %v551 = vpop.permute.xlu0 %550
        %552 = vrot.lane.b32.xlu0 %v389, 113
        %v553 = vpop.permute.xlu0 %552
        %vm554 = vcmp.lt.s32.totalorder %v399, 113
        %v555 = vsel %vm554, %v551, %v553
        %v556 = vsel %vm554, %v549, %v551
        %v557 = vsel %vm554, %v547, %v549
        %v558 = vsel %vm554, %v553, %v547
        %s559 = scalar_lea.vmem %s5, 24
        %v560 = vld [vmem:[%s559] sm:$0xf]
        %v562 = vperm.slane %v560, 0
        %v563 = vperm.slane %v560, 1
        %v564 = vperm.slane %v560, 2
        %v565 = vperm.slane %v560, 3
        %v570 = vmul.f32 %v557, %v562
        %v571 = vmul.f32 %v556, %v563
        %v572 = vmul.f32 %v555, %v564
        %v573 = vmul.f32 %v558, %v565
        %574 = vrot.lane.b32.xlu0 %v386, 112
        %v575 = vpop.permute.xlu0 %574
        %576 = vrot.lane.b32.xlu0 %v387, 112
        %v577 = vpop.permute.xlu0 %576
        %578 = vrot.lane.b32.xlu0 %v388, 112
        %v579 = vpop.permute.xlu0 %578
        %580 = vrot.lane.b32.xlu0 %v389, 112
        %v581 = vpop.permute.xlu0 %580
        %vm582 = vcmp.lt.s32.totalorder %v399, 112
        %v583 = vsel %vm582, %v579, %v581
        %v584 = vsel %vm582, %v577, %v579
        %v585 = vsel %vm582, %v575, %v577
        %v586 = vsel %vm582, %v581, %v575
        %s587 = scalar_lea.vmem %s5, 28
        %v588 = vld [vmem:[%s587] sm:$0xf]
        %v590 = vperm.slane %v588, 0
        %v591 = vperm.slane %v588, 1
        %v592 = vperm.slane %v588, 2
        %v593 = vperm.slane %v588, 3
        %v598 = vmul.f32 %v585, %v590
        %v599 = vmul.f32 %v584, %v591
        %v600 = vmul.f32 %v583, %v592
        %v601 = vmul.f32 %v586, %v593
        %602 = vrot.lane.b32.xlu0 %v386, 111
        %v603 = vpop.permute.xlu0 %602
        %604 = vrot.lane.b32.xlu0 %v387, 111
        %v605 = vpop.permute.xlu0 %604
        %606 = vrot.lane.b32.xlu0 %v388, 111
        %v607 = vpop.permute.xlu0 %606
        %608 = vrot.lane.b32.xlu0 %v389, 111
        %v609 = vpop.permute.xlu0 %608
        %vm610 = vcmp.lt.s32.totalorder %v399, 111
        %v611 = vsel %vm610, %v607, %v609
        %v612 = vsel %vm610, %v605, %v607
        %v613 = vsel %vm610, %v603, %v605
        %v614 = vsel %vm610, %v609, %v603
        %s615 = scalar_lea.vmem %s5, 32
        %v616 = vld [vmem:[%s615] sm:$0xf]
        %v618 = vperm.slane %v616, 0
        %v619 = vperm.slane %v616, 1
        %v620 = vperm.slane %v616, 2
        %v621 = vperm.slane %v616, 3
        %v626 = vmul.f32 %v613, %v618
        %v627 = vmul.f32 %v612, %v619
        %v628 = vmul.f32 %v611, %v620
        %v629 = vmul.f32 %v614, %v621
        %v630 = vpack.c.bf16 %v443, %v415
        %v631 = vpack.c.bf16 %v444, %v416
        %v632 = vpack.c.bf16 %v445, %v417
        %v633 = vpack.c.bf16 %v446, %v418
        %v634 = vpack.c.bf16 %v499, %v471
        %v635 = vpack.c.bf16 %v500, %v472
        %v636 = vpack.c.bf16 %v501, %v473
        %v637 = vpack.c.bf16 %v502, %v474
        %v638 = vpack.c.bf16 %v542, %v514
        %v639 = vpack.c.bf16 %v543, %v515
        %v640 = vpack.c.bf16 %v544, %v516
        %v641 = vpack.c.bf16 %v545, %v517
        %v642 = vpack.c.bf16 %v598, %v570
        %v643 = vpack.c.bf16 %v599, %v571
        %v644 = vpack.c.bf16 %v600, %v572
        %v645 = vpack.c.bf16 %v601, %v573
        %v646 = vpack.c.bf16 %v626, %v626
        %v647 = vpack.c.bf16 %v627, %v627
        %v648 = vpack.c.bf16 %v628, %v628
        %v649 = vpack.c.bf16 %v629, %v629
        %v650 = vld [vmem:[%s2] sm:$0xf]
        %v651 = vld [vmem:[%s4 + $0x8] sm:$0xff]
        %653 = vset.pattern.permute.xlu0 0
        %654 = vperm.xlu0 %653, %v651
        %v655 = vpop.permute.xlu0 %654
        %vm657 = vcmask 588800
        %v659 = vsel %vm657, %v650, 0
        %vm661 = vcmask 1043456
        %v663 = vsel %vm661, %v646, 0
        %v666 = vsel %vm661, %v647, 0
        %v669 = vsel %vm661, %v648, 0
        %v672 = vsel %vm661, %v649, 0
        %674 = vmatpush.bf16.msra.mxu0 0
        %675 = vmatpush.bf16.msra.mxu0 0
        %676 = vmatpush.bf16.msra.mxu0 0
        %677 = vmatpush.bf16.msra.mxu0 %v663
        %678 = vmatpush.bf16.msra.mxu0 %v642
        %679 = vmatpush.bf16.msra.mxu0 %v638
        %680 = vmatpush.bf16.msra.mxu0 %v634
        %681 = vmatpush.bf16.msra.mxu0 %v630
        %682 = vmatmul.bf16.gmra.mxu0 %v659
        %v683 = vpop.f32.mrf.mxu0
        %v684 = vadd.f32 %v655, %v683
        %v685 = vpop.f32.mrf.mxu0
        %686 = vdwg.mxu0
        %687 = vmatpush.bf16.msra.mxu0 0
        %688 = vmatpush.bf16.msra.mxu0 0
        %689 = vmatpush.bf16.msra.mxu0 0
        %690 = vmatpush.bf16.msra.mxu0 %v666
        %691 = vmatpush.bf16.msra.mxu0 %v643
        %692 = vmatpush.bf16.msra.mxu0 %v639
        %693 = vmatpush.bf16.msra.mxu0 %v635
        %694 = vmatpush.bf16.msra.mxu0 %v631
        %695 = vmatmul.bf16.gmra.mxu0 %v659
        %v696 = vpop.f32.mrf.mxu0
        %v697 = vadd.f32 %v655, %v696
        %v698 = vpop.f32.mrf.mxu0
        %699 = vdwg.mxu0
        %700 = vmatpush.bf16.msra.mxu0 0
        %701 = vmatpush.bf16.msra.mxu0 0
        %702 = vmatpush.bf16.msra.mxu0 0
        %703 = vmatpush.bf16.msra.mxu0 %v669
        %704 = vmatpush.bf16.msra.mxu0 %v644
        %705 = vmatpush.bf16.msra.mxu0 %v640
        %706 = vmatpush.bf16.msra.mxu0 %v636
        %707 = vmatpush.bf16.msra.mxu0 %v632
        %708 = vmatmul.bf16.gmra.mxu0 %v659
        %v709 = vpop.f32.mrf.mxu0
        %v710 = vadd.f32 %v655, %v709
        %v711 = vpop.f32.mrf.mxu0
        %712 = vdwg.mxu0
        %713 = vmatpush.bf16.msra.mxu0 0
        %714 = vmatpush.bf16.msra.mxu0 0
        %715 = vmatpush.bf16.msra.mxu0 0
        %716 = vmatpush.bf16.msra.mxu0 %v672
        %717 = vmatpush.bf16.msra.mxu0 %v645
        %718 = vmatpush.bf16.msra.mxu0 %v641
        %719 = vmatpush.bf16.msra.mxu0 %v637
        %720 = vmatpush.bf16.msra.mxu0 %v633
        %721 = vmatmul.bf16.gmra.mxu0 %v659
        %v722 = vpop.f32.mrf.mxu0
        %v723 = vadd.f32 %v655, %v722
        %v724 = vpop.f32.mrf.mxu0
        %725 = vdwg.mxu0
        %v726 = vmax.f32 %v684, 0.0
        %v727 = vmax.f32 %v697, 0.0
        %v728 = vmax.f32 %v710, 0.0
        %v729 = vmax.f32 %v723, 0.0
        %v730 = vld [vmem:[%s3] sm:$0xf]
        %v731 = vld [vmem:[%s3 + $0x4] sm:$0xf]
        %v732 = vld [vmem:[%s3 + $0x8] sm:$0xf]
        %v733 = vld [vmem:[%s3 + $0xc] sm:$0xf]
        %v734 = vpack.c.bf16 %v726, %v726
        %v735 = vpack.c.bf16 %v727, %v727
        %v736 = vpack.c.bf16 %v728, %v728
        %v737 = vpack.c.bf16 %v729, %v729
        %v738 = vld [vmem:[%s4 + $0x10] sm:$0xff]
        %v739 = vld [vmem:[%s4 + $0x18] sm:$0xff]
        %v740 = vld [vmem:[%s4 + $0x20] sm:$0xff]
        %v741 = vld [vmem:[%s4 + $0x28] sm:$0xff]
        %743 = vset.pattern.permute.xlu0 0
        %744 = vperm.xlu0 %743, %v738
        %v745 = vpop.permute.xlu0 %744
        %748 = vset.pattern.permute.xlu0 0
        %749 = vperm.xlu0 %748, %v739
        %v750 = vpop.permute.xlu0 %749
        %753 = vset.pattern.permute.xlu0 0
        %754 = vperm.xlu0 %753, %v740
        %v755 = vpop.permute.xlu0 %754
        %758 = vset.pattern.permute.xlu0 0
        %759 = vperm.xlu0 %758, %v741
        %v760 = vpop.permute.xlu0 %759
        %v766 = vunpack.c.l.b16 %v730
        %v767 = vunpack.c.l.b16 %v731
        %v768 = vunpack.c.l.b16 %v732
        %v769 = vunpack.c.l.b16 %v733
        %v770 = vpack.c.b16 %v767, %v766
        %v771 = vpack.c.b16 %v769, %v768
        %vm772 = vcmask 64512
        %v774 = vsel %vm772, %v770, 0
        %v777 = vsel %vm772, %v771, 0
        %v780 = vsel %vm661, %v734, 0
        %v783 = vsel %vm661, %v735, 0
        %v786 = vsel %vm661, %v736, 0
        %v789 = vsel %vm661, %v737, 0
        %791 = vmatpush.bf16.msra.mxu0 0
        %792 = vmatpush.bf16.msra.mxu0 0
        %793 = vmatpush.bf16.msra.mxu0 0
        %794 = vmatpush.bf16.msra.mxu0 0
        %795 = vmatpush.bf16.msra.mxu0 0
        %796 = vmatpush.bf16.msra.mxu0 0
        %797 = vmatpush.bf16.msra.mxu0 0
        %798 = vmatpush.bf16.msra.mxu0 %v780
        %799 = vmatmul.bf16.gmra.mxu0 %v774
        %v800 = vpop.f32.mrf.mxu0
        %v801 = vadd.f32 %v745, %v800
        %v802 = vpop.f32.mrf.mxu0
        %v803 = vadd.f32 %v750, %v802
        %804 = vmatmul.bf16.gmra.mxu0 %v777
        %v805 = vpop.f32.mrf.mxu0
        %v806 = vadd.f32 %v755, %v805
        %v807 = vpop.f32.mrf.mxu0
        %v808 = vadd.f32 %v760, %v807
        %809 = vdwg.mxu0
        %810 = vmatpush.bf16.msra.mxu0 0
        %811 = vmatpush.bf16.msra.mxu0 0
        %812 = vmatpush.bf16.msra.mxu0 0
        %813 = vmatpush.bf16.msra.mxu0 0
        %814 = vmatpush.bf16.msra.mxu0 0
        %815 = vmatpush.bf16.msra.mxu0 0
        %816 = vmatpush.bf16.msra.mxu0 0
        %817 = vmatpush.bf16.msra.mxu0 %v783
        %818 = vmatmul.bf16.gmra.mxu0 %v774
        %v819 = vpop.f32.mrf.mxu0
        %v820 = vadd.f32 %v745, %v819
        %v821 = vpop.f32.mrf.mxu0
        %v822 = vadd.f32 %v750, %v821
        %823 = vmatmul.bf16.gmra.mxu0 %v777
        %v824 = vpop.f32.mrf.mxu0
        %v825 = vadd.f32 %v755, %v824
        %v826 = vpop.f32.mrf.mxu0
        %v827 = vadd.f32 %v760, %v826
        %828 = vdwg.mxu0
        %829 = vmatpush.bf16.msra.mxu0 0
        %830 = vmatpush.bf16.msra.mxu0 0
        %831 = vmatpush.bf16.msra.mxu0 0
        %832 = vmatpush.bf16.msra.mxu0 0
        %833 = vmatpush.bf16.msra.mxu0 0
        %834 = vmatpush.bf16.msra.mxu0 0
        %835 = vmatpush.bf16.msra.mxu0 0
        %836 = vmatpush.bf16.msra.mxu0 %v786
        %837 = vmatmul.bf16.gmra.mxu0 %v774
        %v838 = vpop.f32.mrf.mxu0
        %v839 = vadd.f32 %v745, %v838
        %v840 = vpop.f32.mrf.mxu0
        %v841 = vadd.f32 %v750, %v840
        %842 = vmatmul.bf16.gmra.mxu0 %v777
        %v843 = vpop.f32.mrf.mxu0
        %v844 = vadd.f32 %v755, %v843
        %v845 = vpop.f32.mrf.mxu0
        %v846 = vadd.f32 %v760, %v845
        %847 = vdwg.mxu0
        %848 = vmatpush.bf16.msra.mxu0 0
        %849 = vmatpush.bf16.msra.mxu0 0
        %850 = vmatpush.bf16.msra.mxu0 0
        %851 = vmatpush.bf16.msra.mxu0 0
        %852 = vmatpush.bf16.msra.mxu0 0
        %853 = vmatpush.bf16.msra.mxu0 0
        %854 = vmatpush.bf16.msra.mxu0 0
        %855 = vmatpush.bf16.msra.mxu0 %v789
        %856 = vmatmul.bf16.gmra.mxu0 %v774
        %v857 = vpop.f32.mrf.mxu0
        %v858 = vadd.f32 %v745, %v857
        %v859 = vpop.f32.mrf.mxu0
        %v860 = vadd.f32 %v750, %v859
        %861 = vmatmul.bf16.gmra.mxu0 %v777
        %v862 = vpop.f32.mrf.mxu0
        %v863 = vadd.f32 %v755, %v862
        %v864 = vpop.f32.mrf.mxu0
        %v865 = vadd.f32 %v760, %v864
        %866 = vdwg.mxu0
        %v867 = vadd.f32 %v801, %v299
        %v868 = vadd.f32 %v820, %v300
        %v869 = vadd.f32 %v839, %v301
        %v870 = vadd.f32 %v858, %v302
        %v871 = vadd.f32 %v803, %v303
        %v872 = vadd.f32 %v822, %v304
        %v873 = vadd.f32 %v841, %v305
        %v874 = vadd.f32 %v860, %v306
        %v875 = vadd.f32 %v806, %v307
        %v876 = vadd.f32 %v825, %v308
        %v877 = vadd.f32 %v844, %v309
        %v878 = vadd.f32 %v863, %v310
        %v879 = vadd.f32 %v808, %v311
        %v880 = vadd.f32 %v827, %v312
        %v881 = vadd.f32 %v846, %v313
        %v882 = vadd.f32 %v865, %v314
        %v883 = vmax.f32 %v867, 0.0
        %v884 = vmax.f32 %v868, 0.0
        %v885 = vmax.f32 %v869, 0.0
        %v886 = vmax.f32 %v870, 0.0
        %v887 = vmax.f32 %v871, 0.0
        %v888 = vmax.f32 %v872, 0.0
        %v889 = vmax.f32 %v873, 0.0
        %v890 = vmax.f32 %v874, 0.0
        %v891 = vmax.f32 %v875, 0.0
        %v892 = vmax.f32 %v876, 0.0
        %v893 = vmax.f32 %v877, 0.0
        %v894 = vmax.f32 %v878, 0.0
        %v895 = vmax.f32 %v879, 0.0
        %v896 = vmax.f32 %v880, 0.0
        %v897 = vmax.f32 %v881, 0.0
        %v898 = vmax.f32 %v882, 0.0
        %899 = vst [vmem:[%s295] sm:$0xff] %v883
        %900 = vst [vmem:[%s295 + $0x8] sm:$0xff] %v884
        %901 = vst [vmem:[%s295 + $0x10] sm:$0xff] %v885
        %902 = vst [vmem:[%s295 + $0x18] sm:$0xff] %v886
        %903 = vst [vmem:[%s295 + $0x20] sm:$0xff] %v887
        %904 = vst [vmem:[%s295 + $0x28] sm:$0xff] %v888
        %905 = vst [vmem:[%s295 + $0x30] sm:$0xff] %v889
        %906 = vst [vmem:[%s295 + $0x38] sm:$0xff] %v890
        %907 = vst [vmem:[%s295 + $0x40] sm:$0xff] %v891
        %908 = vst [vmem:[%s295 + $0x48] sm:$0xff] %v892
        %909 = vst [vmem:[%s295 + $0x50] sm:$0xff] %v893
        %910 = vst [vmem:[%s295 + $0x58] sm:$0xff] %v894
        %911 = vst [vmem:[%s295 + $0x60] sm:$0xff] %v895
        %912 = vst [vmem:[%s295 + $0x68] sm:$0xff] %v896
        %913 = vst [vmem:[%s295 + $0x70] sm:$0xff] %v897
        %914 = vst [vmem:[%s295 + $0x78] sm:$0xff] %v898
        %s915 = sand.u32 %s156, 1
        %s916 = sand.u32 %s156, 1
        %s917 = smul.addr %s916, 128
        %s918 = scalar_lea.vmem [#allocation3], %s917
        // Predicated region
        $region68: #{bottleneck_pallas.1} parent=62 // pred_check
          %p919 = pneg %p166
        $region69: #{bottleneck_pallas.1} parent=62 // pred_check_branch
          %921 = sbr.rel (%p919) target = $region71
        $region70: #{bottleneck_pallas.1} parent=62 // pred_region
          %s922 = smul.u32 4, %s17
          %s923 = smul.addr %s922, 8
          %s924 = scalar_lea.vmem %s6, %s923
          // Predicated region
          $region72: #{bottleneck_pallas.1} parent=70 // pred_check
            _
          $region73: #{bottleneck_pallas.1} parent=70 // pred_check_branch
            %926 = sbr.rel (0) target = $region75
          $region74: #{bottleneck_pallas.1} parent=70 // pred_region
            // Predicated region
            $region76: #{bottleneck_pallas.1} parent=74 // pred_check
              _
            $region77: #{bottleneck_pallas.1} parent=74 // pred_check_branch
              %928 = sbr.rel (0) target = $region79
            $region78: #{bottleneck_pallas.1} parent=74 // pred_region
              loop: start=0, step=1, limit=1
              $region80: #{bottleneck_pallas.1} parent=78 // loop_pre_header
                _
              $region81: #{bottleneck_pallas.1} parent=78 // loop_header
                %s930 = sphi 0, %s934
                %p931 = scmp.ge.s32.totalorder %s930, 1
                %s935 = sphi %s918, %s918
                %s936 = sphi %s924, %s924
              $region82: #{bottleneck_pallas.1} parent=78 // loop_header_branch
                %933 = sbr.rel (%p931) target = $region86
              $region83: #{bottleneck_pallas.1} parent=78 // loop_body
                %v937 = vld [vmem:[%s935] sm:$0xff]
                %938 = vst [vmem:[%s936] sm:$0xff] %v937
                %v939 = vld [vmem:[%s935 + $0x8] sm:$0xff]
                %940 = vst [vmem:[%s936 + $0x8] sm:$0xff] %v939
                %v941 = vld [vmem:[%s935 + $0x10] sm:$0xff]
                %942 = vst [vmem:[%s936 + $0x10] sm:$0xff] %v941
                %v943 = vld [vmem:[%s935 + $0x18] sm:$0xff]
                %944 = vst [vmem:[%s936 + $0x18] sm:$0xff] %v943
                %v945 = vld [vmem:[%s935 + $0x20] sm:$0xff]
                %946 = vst [vmem:[%s936 + $0x40] sm:$0xff] %v945
                %v947 = vld [vmem:[%s935 + $0x28] sm:$0xff]
                %948 = vst [vmem:[%s936 + $0x48] sm:$0xff] %v947
                %v949 = vld [vmem:[%s935 + $0x30] sm:$0xff]
                %950 = vst [vmem:[%s936 + $0x50] sm:$0xff] %v949
                %v951 = vld [vmem:[%s935 + $0x38] sm:$0xff]
                %952 = vst [vmem:[%s936 + $0x58] sm:$0xff] %v951
                %v953 = vld [vmem:[%s935 + $0x40] sm:$0xff]
                %954 = vst [vmem:[%s936 + $0x80] sm:$0xff] %v953
                %v955 = vld [vmem:[%s935 + $0x48] sm:$0xff]
                %956 = vst [vmem:[%s936 + $0x88] sm:$0xff] %v955
                %v957 = vld [vmem:[%s935 + $0x50] sm:$0xff]
                %958 = vst [vmem:[%s936 + $0x90] sm:$0xff] %v957
                %v959 = vld [vmem:[%s935 + $0x58] sm:$0xff]
                %960 = vst [vmem:[%s936 + $0x98] sm:$0xff] %v959
                %v961 = vld [vmem:[%s935 + $0x60] sm:$0xff]
                %962 = vst [vmem:[%s936 + $0xc0] sm:$0xff] %v961
                %v963 = vld [vmem:[%s935 + $0x68] sm:$0xff]
                %964 = vst [vmem:[%s936 + $0xc8] sm:$0xff] %v963
                %v965 = vld [vmem:[%s935 + $0x70] sm:$0xff]
                %966 = vst [vmem:[%s936 + $0xd0] sm:$0xff] %v965
                %v967 = vld [vmem:[%s935 + $0x78] sm:$0xff]
                %968 = vst [vmem:[%s936 + $0xd8] sm:$0xff] %v967
              $region84: #{bottleneck_pallas.1} parent=78 // loop_footer
                %s934 = sadd.s32 1, %s930
              $region85: #{bottleneck_pallas.1} parent=78 // loop_footer_branch
                %929 = sbr.rel target = $region81
              $region86: #{bottleneck_pallas.1} parent=78 // loop_exit
                _
            $region79: #{bottleneck_pallas.1} parent=74 // pred_fallthru
              _
            // Predicated region
            $region87: #{bottleneck_pallas.1} parent=74 // pred_check
              _
            $region88: #{bottleneck_pallas.1} parent=74 // pred_check_branch
              %970 = sbr.rel target = $region90
            $region89: #{bottleneck_pallas.1} parent=74 // pred_region
              _
            $region90: #{bottleneck_pallas.1} parent=74 // pred_fallthru
              _
          $region75: #{bottleneck_pallas.1} parent=70 // pred_fallthru
            _
          %971 = vnop
        $region71: #{bottleneck_pallas.1} parent=62 // pred_fallthru
          _
      $region63: #{bottleneck_pallas.1} parent=5 // pred_fallthru
        _
      %p972 = scmp.le.s32.totalorder 2, %s12
      // Predicated region
      $region91: #{bottleneck_pallas.1} parent=5 // pred_check
        %p973 = pneg %p972
      $region92: #{bottleneck_pallas.1} parent=5 // pred_check_branch
        %975 = sbr.rel (%p973) target = $region94
      $region93: #{bottleneck_pallas.1} parent=5 // pred_region
        %s976 = ssub.s32 %s12, 2
        // Predicated region
        $region95: #{bottleneck_pallas.1} parent=93 // pred_check
          %p977 = pneg %p172
        $region96: #{bottleneck_pallas.1} parent=93 // pred_check_branch
          %979 = sbr.rel (%p977) target = $region98
        $region97: #{bottleneck_pallas.1} parent=93 // pred_region
          %s980 = sand.u32 %s157, 1
          %s981 = sand.u32 %s157, 1
          %s982 = smul.addr %s981, 128
          %s983 = scalar_lea.vmem [#allocation3], %s982
        $region98: #{bottleneck_pallas.1} parent=93 // pred_fallthru
          _
      $region94: #{bottleneck_pallas.1} parent=5 // pred_fallthru
        _
    $region6: #{bottleneck_pallas.1} parent=1 // loop_footer
      %s16 = sadd.s32 1, %s12
    $region7: #{bottleneck_pallas.1} parent=1 // loop_footer_branch
      %11 = sbr.rel target = $region3
    $region8: #{bottleneck_pallas.1} parent=1 // loop_exit
      _

</llo_original>
